<compile_context>
chip_gen: v7x
topology: tpu7x:2x2x1
jax: 0.10.0
libtpu: 0.0.40
codegen_flags: <defaults>
</compile_context>

<pallas_src>
import jax
import jax.numpy as jnp
from jax import lax
from jax.experimental import pallas as pl
from jax.experimental.pallas import tpu as pltpu


# dot_general dimension numbers (no batch dims -> plain 2-D MXU matmuls).
_DOT_LAST_LAST = (((1,), (1,)), ((), ()))    # (M, K) x (N, K) -> (M, N)   (A @ B.T)
_DOT_LAST_FIRST = (((1,), (0,)), ((), ()))   # (M, K) x (K, N) -> (M, N)   (A @ B)


# ---------------------------------------------------------------------------
# In-kernel helpers.
# ---------------------------------------------------------------------------

def _softmax_rows(scores):
    """Row softmax of a (TB, L) tile.  Normalization uses pl.reciprocal +
    multiply (EUP slot) instead of a per-element divide; approx=True would make
    it a single-pass EUP op but is kept exact to preserve f32-level accuracy."""
    m = jnp.max(scores, axis=1, keepdims=True)
    e = jnp.exp(scores - m)
    inv = pl.reciprocal(jnp.sum(e, axis=1, keepdims=True), approx=False)
    return e * inv


def _split_batch(e):
    """(L, TB, H) time-major block -> list of TB (L, H) slabs (TB small, static)."""
    return [e[:, b, :] for b in range(e.shape[1])]


def _scores_from_query(q, e_slabs):
    """scores[b, l] = sum_h q[b, h] * e[l, b, h], as TB small 2-D MXU contractions."""
    rows = [
        lax.dot_general(q[b:b + 1, :], e_b, _DOT_LAST_LAST,
                        preferred_element_type=jnp.float32)            # (1, L)
        for b, e_b in enumerate(e_slabs)
    ]
    return jnp.concatenate(rows, axis=0)                                # (TB, L)


def _context_from_weights(p, e_slabs):
    """context[b, h] = sum_l p[b, l] * e[l, b, h] (the decoder's bmm, fused)."""
    rows = [
        lax.dot_general(p[b:b + 1, :], e_b, _DOT_LAST_FIRST,
                        preferred_element_type=jnp.float32)             # (1, H)
        for b, e_b in enumerate(e_slabs)
    ]
    return jnp.concatenate(rows, axis=0)                                 # (TB, H)


# ---------------------------------------------------------------------------
# Attention (+ fused context) kernels.  Per grid step: hidden (TB, H), enc
# (L, TB, H) time-major; outputs are lane-dense (TB, L) weights and (TB, H)
# context.
# ---------------------------------------------------------------------------

def _attn_dot_kernel(h_ref, e_ref, w_out_ref, ctx_ref):
    h = h_ref[...]                                   # (TB, H)
    e_slabs = _split_batch(e_ref[...])               # TB x (L, H)
    p = _softmax_rows(_scores_from_query(h, e_slabs))
    w_out_ref[...] = p.astype(w_out_ref.dtype)
    ctx_ref[...] = _context_from_weights(p, e_slabs).astype(ctx_ref.dtype)


def _attn_general_kernel(h_ref, e_ref, w_ref, b_ref, w_out_ref, ctx_ref):
    h = h_ref[...]                                   # (TB, H)
    e = e_ref[...]                                   # (L, TB, H)
    w = w_ref[...]                                   # (H, H)  torch Linear weight (out, in)
    bias = b_ref[...]                                # (1, H)
    # scores = sum_k h * (e @ W^T + bias)  ==  (h @ W) . e  +  h . bias
    # (h folded into W first: no (L, TB, H) energy tensor, O(B*H^2 + B*L*H) FLOPs)
    hw = jnp.dot(h, w, preferred_element_type=jnp.float32)                      # (TB, H)
    bias_term = lax.dot_general(h, bias, _DOT_LAST_LAST,
                                preferred_element_type=jnp.float32)              # (TB, 1)
    e_slabs = _split_batch(e)
    p = _softmax_rows(_scores_from_query(hw, e_slabs) + bias_term)
    w_out_ref[...] = p.astype(w_out_ref.dtype)
    ctx_ref[...] = _context_from_weights(p, e_slabs).astype(ctx_ref.dtype)


def _attn_concat_kernel(h_ref, e_ref, w1_ref, w2_ref, b_ref, v_ref, w_out_ref, ctx_ref):
    h = h_ref[...]                                   # (TB, H)
    e = e_ref[...]                                   # (L, TB, H)
    w1 = w1_ref[...]                                 # (H, H)  acts on the hidden half
    w2 = w2_ref[...]                                 # (H, H)  acts on the encoder half
    bias = b_ref[...]                                # (1, H)
    v = v_ref[...]                                   # (1, H)
    # cat([h, e], -1) @ W^T == h @ W1^T + e @ W2^T ; hidden part done once per row.
    hp = lax.dot_general(h, w1, _DOT_LAST_LAST,
                         preferred_element_type=jnp.float32) + bias               # (TB, H)
    e_slabs = _split_batch(e)
    rows = []
    for b, e_b in enumerate(e_slabs):
        ep = lax.dot_general(e_b, w2, _DOT_LAST_LAST,
                             preferred_element_type=jnp.float32)                  # (L, H)
        energy = jnp.tanh(hp[b:b + 1, :] + ep)                                    # (L, H)
        rows.append(lax.dot_general(v, energy, _DOT_LAST_LAST,
                                    preferred_element_type=jnp.float32))          # (1, L)
    p = _softmax_rows(jnp.concatenate(rows, axis=0))
    w_out_ref[...] = p.astype(w_out_ref.dtype)
    ctx_ref[...] = _context_from_weights(p, e_slabs).astype(ctx_ref.dtype)


# ---------------------------------------------------------------------------
# GRU cell and output-head kernels (small, fully VMEM resident).
# ---------------------------------------------------------------------------

def _sigmoid(x):
    return 1.0 / (1.0 + jnp.exp(-x))


def _gru_cell_kernel(x_ref, h_ref, wih_ref, whh_ref, bih_ref, bhh_ref, hnew_ref):
    x = x_ref[...]                                   # (B, E)
    h = h_ref[...]                                   # (B, H)
    hid = h.shape[1]
    gi = lax.dot_general(x, wih_ref[...], _DOT_LAST_LAST,
                         preferred_element_type=jnp.float32) + bih_ref[...]       # (B, 3H)
    gh = lax.dot_general(h, whh_ref[...], _DOT_LAST_LAST,
                         preferred_element_type=jnp.float32) + bhh_ref[...]       # (B, 3H)
    r = _sigmoid(gi[:, :hid] + gh[:, :hid])
    z = _sigmoid(gi[:, hid:2 * hid] + gh[:, hid:2 * hid])
    n = jnp.tanh(gi[:, 2 * hid:] + r * gh[:, 2 * hid:])
    hnew_ref[...] = ((1.0 - z) * n + z * h).astype(hnew_ref.dtype)


def _decoder_head_kernel(r_ref, c_ref, wc1_ref, wc2_ref, bc_ref, wo_ref, bo_ref,
                         logp_ref, rep_ref):
    r = r_ref[...]                                   # (B, H)  rnn_output
    c = c_ref[...]                                   # (B, H)  context
    # cat([rnn, ctx], -1) @ Wc^T == rnn @ Wc1^T + ctx @ Wc2^T
    concat_out = (lax.dot_general(r, wc1_ref[...], _DOT_LAST_LAST,
                                  preferred_element_type=jnp.float32)
                  + lax.dot_general(c, wc2_ref[...], _DOT_LAST_LAST,
                                    preferred_element_type=jnp.float32)
                  + bc_ref[...])
    concat_out = jnp.maximum(concat_out, 0.0)        # ReLU
    rep_ref[...] = concat_out.astype(rep_ref.dtype)
    logits = lax.dot_general(concat_out, wo_ref[...], _DOT_LAST_LAST,
                             preferred_element_type=jnp.float32) + bo_ref[...]    # (B, V)
    m = jnp.max(logits, axis=1, keepdims=True)
    shifted = logits - m
    lse = jnp.log(jnp.sum(jnp.exp(shifted), axis=1, keepdims=True))
    logp_ref[...] = (shifted - lse).astype(logp_ref.dtype)


# ---------------------------------------------------------------------------
# Wrappers (glue): BlockSpec plumbing, cheap reshapes, weight splits.
# ---------------------------------------------------------------------------

def _vmem_spec():
    return pl.BlockSpec(memory_space=pltpu.MemorySpace.VMEM)


def attn_context_forward(method, rnn_output, encoder_outputs, params):
    """Fused Luong attention + context.

    rnn_output: (1, B, H) f32; encoder_outputs: (L, B, H) f32 (time-major, as in
    PyTorch).  Returns (attn_weights (B, 1, L), context (B, H)), exactly like
    Attn.forward followed by attn_weights.bmm(enc.transpose(0, 1)).squeeze(1).
    """
    L, B, H = encoder_outputs.shape
    h = rnn_output.reshape(B, H)

    # Batch tiling: 8 rows per grid step when the batch allows (sublane aligned),
    # otherwise the full batch (full-dim blocks are always legal).
    tb = 8 if B % 8 == 0 else B
    nb = B // tb

    h_spec = pl.BlockSpec((tb, H), lambda i: (i, 0))
    e_spec = pl.BlockSpec((L, tb, H), lambda i: (0, i, 0))

    def _replicated(shape):
        zeros = (0,) * len(shape)
        return pl.BlockSpec(shape, lambda i, _z=zeros: _z)

    if method == 'dot':
        kernel, extra = _attn_dot_kernel, ()
    elif method == 'general':
        kernel, extra = _attn_general_kernel, (params['attn_w'], params['attn_b'])
    elif method == 'concat':
        w = params['attn_w']                           # (H, 2H)
        kernel = _attn_concat_kernel
        extra = (w[:, :H], w[:, H:], params['attn_b'], params['v'])
    else:
        raise ValueError(method, 'is not an appropriate attention method.')

    weights, context = pl.pallas_call(
        kernel,
        grid=(nb,),
        in_specs=[h_spec, e_spec] + [_replicated(a.shape) for a in extra],
        out_specs=(pl.BlockSpec((tb, L), lambda i: (i, 0)),
                   pl.BlockSpec((tb, H), lambda i: (i, 0))),
        out_shape=(jax.ShapeDtypeStruct((B, L), jnp.float32),
                   jax.ShapeDtypeStruct((B, H), jnp.float32)),
        compiler_params=pltpu.CompilerParams(
            dimension_semantics=("parallel",),
            vmem_limit_bytes=32 * 1024 * 1024),
    )(h, encoder_outputs, *extra)

    # Lane-dense (B, L) comes out of the kernel; the PyTorch (B, 1, L) unsqueeze
    # is free wrapper metadata.
    return weights[:, None, :], context


def gru_cell(x, h_prev, params):
    B, H = h_prev.shape
    return pl.pallas_call(
        _gru_cell_kernel,
        out_shape=jax.ShapeDtypeStruct((B, H), jnp.float32),
        in_specs=[_vmem_spec()] * 6,
        out_specs=_vmem_spec(),
    )(x, h_prev, params['gru_w_ih'], params['gru_w_hh'],
      params['gru_b_ih'], params['gru_b_hh'])


def decoder_head(rnn_output, context, params):
    B, H = rnn_output.shape
    V = params['out_w'].shape[0]
    wc = params['concat_w']                            # (H, 2H)
    return pl.pallas_call(
        _decoder_head_kernel,
        out_shape=(jax.ShapeDtypeStruct((B, V), jnp.float32),
                   jax.ShapeDtypeStruct((B, H), jnp.float32)),
        in_specs=[_vmem_spec()] * 7,
        out_specs=(_vmem_spec(), _vmem_spec()),
    )(rnn_output, context, wc[:, :H], wc[:, H:],
      params['concat_b'], params['out_w'], params['out_b'])


def luong_attn_decoder_forward(params, input_step, last_hidden, encoder_outputs, method):
    """One decode step of LuongAttnDecoderRNN (GRU cell, nlayers=1, eval mode).

    input_step: (B,) int32 token ids; last_hidden: (1, B, H); encoder_outputs: (L, B, H).
    Returns (log_probs (B, V), hidden (1, B, H), attn_weights (B, 1, L), representation (B, H)).
    """
    # TODO(synk): embedding gather + eval-mode dropout (identity) stay in XLA; a
    # data-dependent gather kernel is not worth it at these sizes.
    # TODO(synk): cell_type='lstm' and nlayers>1 not implemented (GRU, 1 layer).
    embedded = jnp.take(params['embedding'], input_step, axis=0)        # (B, E)
    h_prev = last_hidden[0]                                             # (B, H)
    rnn_output = gru_cell(embedded, h_prev, params)                     # (B, H)
    attn_weights, context = attn_context_forward(
        method, rnn_output[None], encoder_outputs, params)
    output, representation = decoder_head(rnn_output, context, params)
    return output, rnn_output[None], attn_weights, representation


# ---------------------------------------------------------------------------
# Pure-JAX references for correctness checks.
# ---------------------------------------------------------------------------

def attn_reference(method, rnn_output, encoder_outputs, params):
    with jax.default_matmul_precision('highest'):
        L, B, H = encoder_outputs.shape
        hidden = rnn_output                                             # (1, B, H)
        if method == 'dot':
            scores = jnp.sum(hidden * encoder_outputs, axis=2)          # (L, B)
        elif method == 'general':
            energy = jnp.einsum('lbh,kh->lbk', encoder_outputs,
                                params['attn_w']) + params['attn_b'][0]
            scores = jnp.sum(hidden * energy, axis=2)
        elif method == 'concat':
            h_exp = jnp.broadcast_to(hidden, (L, B, H))
            cat = jnp.concatenate([h_exp, encoder_outputs], axis=2)
            energy = jnp.tanh(jnp.einsum('lbj,kj->lbk', cat,
                                         params['attn_w']) + params['attn_b'][0])
            scores = jnp.sum(params['v'][0] * energy, axis=2)
        weights = jax.nn.softmax(scores.T, axis=1)                      # (B, L)
        context = jnp.einsum('bl,lbh->bh', weights, encoder_outputs)
        return weights[:, None, :], context


def gru_reference(x, h, params):
    H = h.shape[1]
    gi = x @ params['gru_w_ih'].T + params['gru_b_ih'][0]
    gh = h @ params['gru_w_hh'].T + params['gru_b_hh'][0]
    r = jax.nn.sigmoid(gi[:, :H] + gh[:, :H])
    z = jax.nn.sigmoid(gi[:, H:2 * H] + gh[:, H:2 * H])
    n = jnp.tanh(gi[:, 2 * H:] + r * gh[:, 2 * H:])
    return (1.0 - z) * n + z * h


def decoder_reference(params, input_step, last_hidden, encoder_outputs, method):
    with jax.default_matmul_precision('highest'):
        embedded = params['embedding'][input_step]
        rnn_output = gru_reference(embedded, last_hidden[0], params)
        attn_weights, context = attn_reference(
            method, rnn_output[None], encoder_outputs, params)
        concat_input = jnp.concatenate([rnn_output, context], axis=1)
        concat_output = jax.nn.relu(
            concat_input @ params['concat_w'].T + params['concat_b'][0])
        logits = concat_output @ params['out_w'].T + params['out_b'][0]
        output = jax.nn.log_softmax(logits, axis=1)
        return output, rnn_output[None], attn_weights, concat_output


# ---------------------------------------------------------------------------
# Deterministic parameter init + demo.
# ---------------------------------------------------------------------------

def init_params(method, vocab_size, embedding_size, hidden_size, output_size, key):
    ks = jax.random.split(key, 12)
    s = 0.1
    p = {
        'embedding': jax.random.normal(ks[0], (vocab_size, embedding_size), jnp.float32) * s,
        'gru_w_ih': jax.random.normal(ks[1], (3 * hidden_size, embedding_size), jnp.float32) * s,
        'gru_w_hh': jax.random.normal(ks[2], (3 * hidden_size, hidden_size), jnp.float32) * s,
        'gru_b_ih': jax.random.normal(ks[3], (1, 3 * hidden_size), jnp.float32) * s,
        'gru_b_hh': jax.random.normal(ks[4], (1, 3 * hidden_size), jnp.float32) * s,
        'concat_w': jax.random.normal(ks[5], (hidden_size, 2 * hidden_size), jnp.float32) * s,
        'concat_b': jax.random.normal(ks[6], (1, hidden_size), jnp.float32) * s,
        'out_w': jax.random.normal(ks[7], (output_size, hidden_size), jnp.float32) * s,
        'out_b': jax.random.normal(ks[8], (1, output_size), jnp.float32) * s,
    }
    if method == 'general':
        p['attn_w'] = jax.random.normal(ks[9], (hidden_size, hidden_size), jnp.float32) * s
        p['attn_b'] = jax.random.normal(ks[10], (1, hidden_size), jnp.float32) * s
    elif method == 'concat':
        p['attn_w'] = jax.random.normal(ks[9], (hidden_size, 2 * hidden_size), jnp.float32) * s
        p['attn_b'] = jax.random.normal(ks[10], (1, hidden_size), jnp.float32) * s
        p['v'] = jax.random.normal(ks[11], (1, hidden_size), jnp.float32) * s
    return p


if __name__ == "__main__":
    B, L, H, E, V, VOCAB = 2, 8, 32, 16, 40, 50
    key = jax.random.PRNGKey(0)
    k_rnn, k_enc, k_par, k_tok, k_hid = jax.random.split(key, 5)

    encoder_outputs = jax.random.normal(k_enc, (L, B, H), jnp.float32)   # (L, B, H)
    last_hidden = jax.random.normal(k_hid, (1, B, H), jnp.float32)       # (1, B, H)
    input_step = jax.random.randint(k_tok, (B,), 0, VOCAB)               # (B,)
    rnn_output = jax.random.normal(k_rnn, (1, B, H), jnp.float32)        # (1, B, H)

    for method in ('dot', 'general', 'concat'):
        params = init_params(method, VOCAB, E, H, V, k_par)

        # --- fused attention + context kernel vs. reference -------------------
        w_pal, c_pal = jax.block_until_ready(
            attn_context_forward(method, rnn_output, encoder_outputs, params))
        w_ref, c_ref = attn_reference(method, rnn_output, encoder_outputs, params)
        assert w_pal.shape == (B, 1, L) and c_pal.shape == (B, H), method
        assert jnp.allclose(w_pal, w_ref, atol=1e-4, rtol=1e-4), method
        assert jnp.allclose(c_pal, c_ref, atol=1e-4, rtol=1e-4), method
        assert jnp.allclose(jnp.sum(w_pal, axis=2), 1.0, atol=1e-4), method

        # --- full decoder step (GRU + attention + output head kernels) --------
        outs = jax.block_until_ready(
            luong_attn_decoder_forward(params, input_step, last_hidden,
                                       encoder_outputs, method))
        refs = decoder_reference(params, input_step, last_hidden,
                                 encoder_outputs, method)
        for got, want in zip(outs, refs):
            assert got.shape == want.shape, method
            assert jnp.allclose(got, want, atol=1e-4, rtol=1e-4), method

    print("KERNEL_OK")
</pallas_src>

<mosaic_0001>
module attributes {stable_mosaic.version = 11 : i64} {
  func.func @_attn_dot_kernel(%arg0: i32, %arg1: memref<2x32xf32, #tpu.memory_space<vmem>>, %arg2: memref<8x2x32xf32, #tpu.memory_space<vmem>>, %arg3: memref<2x8xf32, #tpu.memory_space<vmem>>, %arg4: memref<2x32xf32, #tpu.memory_space<vmem>>) attributes {dimension_semantics = [#tpu.dimension_semantics<parallel>], iteration_bounds = array<i64: 1>, scalar_prefetch = 0 : i64, scratch_operands = 0 : i64, tpu.core_type = #tpu.core_type<tc>, window_params = [{transform_indices = @transform_0, window_bounds = array<i64: 2, 32>}, {transform_indices = @transform_1, window_bounds = array<i64: 8, 2, 32>}, {transform_indices = @transform_2, window_bounds = array<i64: 2, 8>}, {transform_indices = @transform_3, window_bounds = array<i64: 2, 32>}]} {
    %c0 = arith.constant 0 : index
    %c0_0 = arith.constant 0 : index
    %0 = vector.load %arg1[%c0, %c0_0] : memref<2x32xf32, #tpu.memory_space<vmem>>, vector<2x32xf32>
    %c0_1 = arith.constant 0 : index
    %c0_2 = arith.constant 0 : index
    %c0_3 = arith.constant 0 : index
    %1 = vector.load %arg2[%c0_1, %c0_2, %c0_3] : memref<8x2x32xf32, #tpu.memory_space<vmem>>, vector<8x2x32xf32>
    %2 = vector.extract_strided_slice %1 {offsets = [0, 0, 0], sizes = [8, 1, 32], strides = [1, 1, 1]} : vector<8x2x32xf32> to vector<8x1x32xf32>
    %3 = vector.shape_cast %2 : vector<8x1x32xf32> to vector<8x32xf32>
    %4 = vector.extract_strided_slice %1 {offsets = [0, 1, 0], sizes = [8, 1, 32], strides = [1, 1, 1]} : vector<8x2x32xf32> to vector<8x1x32xf32>
    %5 = vector.shape_cast %4 : vector<8x1x32xf32> to vector<8x32xf32>
    %6 = vector.extract_strided_slice %0 {offsets = [0, 0], sizes = [1, 32], strides = [1, 1]} : vector<2x32xf32> to vector<1x32xf32>
    %cst = arith.constant dense<0.000000e+00> : vector<1x8xf32>
    %7 = tpu.matmul %6, %3, %cst {dimension_numbers = #tpu.dot_dimension_numbers<[1], [1], [0], [0], [0, 0, 1, 0], [], []>} : vector<1x32xf32>, vector<8x32xf32>, vector<1x8xf32> -> vector<1x8xf32>
    %8 = vector.extract_strided_slice %0 {offsets = [1, 0], sizes = [1, 32], strides = [1, 1]} : vector<2x32xf32> to vector<1x32xf32>
    %cst_4 = arith.constant dense<0.000000e+00> : vector<1x8xf32>
    %9 = tpu.matmul %8, %5, %cst_4 {dimension_numbers = #tpu.dot_dimension_numbers<[1], [1], [0], [0], [0, 0, 1, 0], [], []>} : vector<1x32xf32>, vector<8x32xf32>, vector<1x8xf32> -> vector<1x8xf32>
    %10 = tpu.concatenate %7, %9 in 0 : vector<1x8xf32>, vector<1x8xf32> -> vector<2x8xf32>
    %cst_5 = arith.constant dense<0xFF800000> : vector<2xf32>
    %11 = vector.multi_reduction <maximumf>, %10, %cst_5 [1] : vector<2x8xf32> to vector<2xf32>
    %12 = vector.shape_cast %11 : vector<2xf32> to vector<2x1xf32>
    %13 = vector.broadcast %12 : vector<2x1xf32> to vector<2x8xf32>
    %14 = arith.subf %10, %13 : vector<2x8xf32>
    %15 = math.exp %14 : vector<2x8xf32>
    %cst_6 = arith.constant dense<0.000000e+00> : vector<2xf32>
    %16 = vector.multi_reduction <add>, %15, %cst_6 [1] : vector<2x8xf32> to vector<2xf32>
    %17 = vector.shape_cast %16 : vector<2xf32> to vector<2x1xf32>
    %18 = tpu.reciprocal %17 : vector<2x1xf32> -> vector<2x1xf32>
    %19 = vector.broadcast %18 : vector<2x1xf32> to vector<2x8xf32>
    %20 = arith.mulf %15, %19 : vector<2x8xf32>
    %c0_7 = arith.constant 0 : index
    %c0_8 = arith.constant 0 : index
    %21 = vector.load %arg3[%c0_7, %c0_8] : memref<2x8xf32, #tpu.memory_space<vmem>>, vector<2x8xf32>
    tpu.vector_store %arg3[%c0_7, %c0_8], %20 {strides = array<i32>} : memref<2x8xf32, #tpu.memory_space<vmem>>, vector<2x8xf32>,
    %22 = vector.extract_strided_slice %20 {offsets = [0, 0], sizes = [1, 8], strides = [1, 1]} : vector<2x8xf32> to vector<1x8xf32>
    %cst_9 = arith.constant dense<0.000000e+00> : vector<1x32xf32>
    %23 = tpu.matmul %22, %3, %cst_9 {dimension_numbers = #tpu.dot_dimension_numbers<[1], [0], [0], [1], [0, 0, 1, 1], [], []>} : vector<1x8xf32>, vector<8x32xf32>, vector<1x32xf32> -> vector<1x32xf32>
    %24 = vector.extract_strided_slice %20 {offsets = [1, 0], sizes = [1, 8], strides = [1, 1]} : vector<2x8xf32> to vector<1x8xf32>
    %cst_10 = arith.constant dense<0.000000e+00> : vector<1x32xf32>
    %25 = tpu.matmul %24, %5, %cst_10 {dimension_numbers = #tpu.dot_dimension_numbers<[1], [0], [0], [1], [0, 0, 1, 1], [], []>} : vector<1x8xf32>, vector<8x32xf32>, vector<1x32xf32> -> vector<1x32xf32>
    %26 = tpu.concatenate %23, %25 in 0 : vector<1x32xf32>, vector<1x32xf32> -> vector<2x32xf32>
    %c0_11 = arith.constant 0 : index
    %c0_12 = arith.constant 0 : index
    %27 = vector.load %arg4[%c0_11, %c0_12] : memref<2x32xf32, #tpu.memory_space<vmem>>, vector<2x32xf32>
    tpu.vector_store %arg4[%c0_11, %c0_12], %26 {strides = array<i32>} : memref<2x32xf32, #tpu.memory_space<vmem>>, vector<2x32xf32>,
    return
  }
  func.func @transform_0(%arg0: i32) -> (i32, i32) {
    %c0_i32 = arith.constant 0 : i32
    %c0_i32_0 = arith.constant 0 : i32
    return %arg0, %c0_i32 : i32, i32
  }
  func.func @transform_1(%arg0: i32) -> (i32, i32, i32) {
    %c0_i32 = arith.constant 0 : i32
    %c0_i32_0 = arith.constant 0 : i32
    %c0_i32_1 = arith.constant 0 : i32
    return %c0_i32, %arg0, %c0_i32_0 : i32, i32, i32
  }
  func.func @transform_2(%arg0: i32) -> (i32, i32) {
    %c0_i32 = arith.constant 0 : i32
    %c0_i32_0 = arith.constant 0 : i32
    return %arg0, %c0_i32 : i32, i32
  }
  func.func @transform_3(%arg0: i32) -> (i32, i32) {
    %c0_i32 = arith.constant 0 : i32
    %c0_i32_0 = arith.constant 0 : i32
    return %arg0, %c0_i32 : i32, i32
  }
}

</mosaic_0001>

<llo_original>
// kernel: tpu_custom_call.1
$region0: #{tpu_custom_call.1}
  #allocation0 [shape = 'u32[]', space=smem, size = 0x4, offset = 0x4, fixed_abs, tag = 'smem constant byte address 0x4 - core index']
  #allocation1 [shape = 'u32[144,128]{1,0:T(1,128)}', space=vmem, size = 0x12000, scoped, tag = 'internal scratch']
  %s0 = inlined_call_operand.hbm [shape: f32[2,32], index: 0, kind: input, shape index: {}]
  %s1 = inlined_call_operand.hbm [shape: f32[8,2,32], index: 1, kind: input, shape index: {}]
  %s2 = inlined_call_operand.hbm [shape: f32[2,8], index: 2, kind: output, shape index: {0}]
  %s3 = inlined_call_operand.hbm [shape: f32[2,32], index: 3, kind: output, shape index: {1}]
  %4 = xla_tuple %s2, %s3
  %s5 = sld [smem:[#allocation0]]
  $region34: #{tpu_custom_call.1} parent=0
    _
  %s7 = ssub.s32 1, %s5
  %s8 = scalar_select 0, %s7, %s5
  $region1: #{tpu_custom_call.1} parent=0
    #allocation2 [shape = 'u8[1024]{0}', space=vmem, size = 0x400, scoped, tag = 'input window, operand 0, single buffered']
    #allocation3 [shape = 's32[1]{0}', space=sflag, size = 0x4, scoped, tag = 'scoped memory for tpu_custom_call.1']
    #allocation4 [shape = 's32[1]{0}', space=sflag, size = 0x4, scoped, tag = 'scoped memory for tpu_custom_call.1']
    #allocation5 [shape = 'u8[8192]{0}', space=vmem, size = 0x2000, scoped, tag = 'input window, operand 1, single buffered']
    #allocation6 [shape = 's32[1]{0}', space=sflag, size = 0x4, scoped, tag = 'scoped memory for tpu_custom_call.1']
    #allocation7 [shape = 'u8[1024]{0}', space=vmem, size = 0x400, scoped, tag = 'output window, operand 0, single buffered']
    #allocation8 [shape = 'u8[1024]{0}', space=vmem, size = 0x400, scoped, tag = 'output window, operand 1, single buffered']
    #allocation9 [shape = 's32[1]{0}', space=sflag, size = 0x4, scoped, tag = 'scoped memory for tpu_custom_call.1']
    %9 = vsyncpa [#allocation3], 0
    %10 = vsyncpa [#allocation6], 0
    %11 = vsyncpa [#allocation4], 0
    %12 = vsyncpa [#allocation9], 0
    // Predicated region
    $region2: #{tpu_custom_call.1} parent=1 // pred_check
      _
    $region3: #{tpu_custom_call.1} parent=1 // pred_check_branch
      %14 = sbr.rel (0) target = $region5
    $region4: #{tpu_custom_call.1} parent=1 // pred_region
      %s16 = ssub.s32 32, 32
      %17 = vsyncadd [#allocation3], %s16
      %s19 = sshll.u32 [#allocation2], 4
      %s20 = int_to_ptr.vmem [resolvable:$true] %s19
      %22 = dma.hbm_to_vmem [thread:$0]  %s0, 32, %s20, [#allocation3]
    $region5: #{tpu_custom_call.1} parent=1 // pred_fallthru
      _
    // Predicated region
    $region6: #{tpu_custom_call.1} parent=1 // pred_check
      _
    $region7: #{tpu_custom_call.1} parent=1 // pred_check_branch
      %24 = sbr.rel (0) target = $region9
    $region8: #{tpu_custom_call.1} parent=1 // pred_region
      %s26 = ssub.s32 256, 256
      %27 = vsyncadd [#allocation6], %s26
      %s28 = sshll.u32 [#allocation5], 4
      %s29 = int_to_ptr.vmem [resolvable:$true] %s28
      %34 = dma.hbm_to_vmem [thread:$0]  %s1, 256, %s29, [#allocation6], 32, 32, 2
    $region9: #{tpu_custom_call.1} parent=1 // pred_fallthru
      _
    // Predicated region
    $region10: #{tpu_custom_call.1} parent=1 // pred_check
      _
    $region11: #{tpu_custom_call.1} parent=1 // pred_check_branch
      %36 = sbr.rel (0) target = $region13
    $region12: #{tpu_custom_call.1} parent=1 // pred_region
      %37 = dma.done [#allocation3], 32
    $region13: #{tpu_custom_call.1} parent=1 // pred_fallthru
      _
    // Predicated region
    $region14: #{tpu_custom_call.1} parent=1 // pred_check
      _
    $region15: #{tpu_custom_call.1} parent=1 // pred_check_branch
      %39 = sbr.rel (0) target = $region17
    $region16: #{tpu_custom_call.1} parent=1 // pred_region
      %40 = dma.done [#allocation6], 256
    $region17: #{tpu_custom_call.1} parent=1 // pred_fallthru
      _
    %v41 = vld [vmem:[#allocation2] sm:$0x3]
    %v42 = vld [vmem:[#allocation5] sm:$0x3]
    %v43 = vld [vmem:[#allocation5 + $0x2] sm:$0x3]
    %v44 = vld [vmem:[#allocation5 + $0x4] sm:$0x3]
    %v45 = vld [vmem:[#allocation5 + $0x6] sm:$0x3]
    %v46 = vld [vmem:[#allocation5 + $0x8] sm:$0x3]
    %v47 = vld [vmem:[#allocation5 + $0xa] sm:$0x3]
    %v48 = vld [vmem:[#allocation5 + $0xc] sm:$0x3]
    %v49 = vld [vmem:[#allocation5 + $0xe] sm:$0x3]
    %v58 = vrot.slane %v43, 7
    %vm59 = vcmask 1041409
    %v60 = vsel %vm59, %v58, %v42
    %v61 = vrot.slane %v44, 6
    %vm62 = vcmask 1042434
    %v63 = vsel %vm62, %v61, %v60
    %v64 = vrot.slane %v45, 5
    %vm65 = vcmask 1043459
    %v66 = vsel %vm65, %v64, %v63
    %v67 = vrot.slane %v46, 4
    %vm68 = vcmask 1044484
    %v69 = vsel %vm68, %v67, %v66
    %v70 = vrot.slane %v47, 3
    %vm71 = vcmask 1045509
    %v72 = vsel %vm71, %v70, %v69
    %v73 = vrot.slane %v48, 2
    %vm74 = vcmask 1046534
    %v75 = vsel %vm74, %v73, %v72
    %v76 = vrot.slane %v49, 1
    %vm77 = vcmask 1047559
    %v78 = vsel %vm77, %v76, %v75
    %vm79 = vcmask 261120
    %v81 = vsel %vm79, %v41, 0
    %v83 = vsel %vm79, %v78, 0
    %85 = vmatprep.subr.mxu0 0.0
    %86 = vmatpush1.xpose.msra.mxu0 %v83
    %87 = vmatprep.subr.mxu0 0.0
    %88 = vmatpush1.xpose.msra.mxu0 0.0
    %89 = vmatprep.subr.mxu0 0.0
    %90 = vmatpush1.xpose.msra.mxu0 0.0
    %91 = vmatprep.subr.mxu0 0.0
    %92 = vmatpush1.xpose.msra.mxu0 0.0
    %93 = vmatprep.subr.mxu0 0.0
    %94 = vmatpush1.xpose.msra.mxu0 0.0
    %95 = vmatprep.subr.mxu0 0.0
    %96 = vmatpush1.xpose.msra.mxu0 0.0
    %97 = vmatprep.subr.mxu0 0.0
    %98 = vmatpush1.xpose.msra.mxu0 0.0
    %99 = vmatprep.subr.mxu0 0.0
    %100 = vmatpush1.xpose.msra.mxu0 0.0
    %101 = vmatprep.subr.mxu0 0.0
    %102 = vmatpush1.xpose.msra.mxu0 0.0
    %103 = vmatprep.subr.mxu0 0.0
    %104 = vmatpush1.xpose.msra.mxu0 0.0
    %105 = vmatprep.subr.mxu0 0.0
    %106 = vmatpush1.xpose.msra.mxu0 0.0
    %107 = vmatprep.subr.mxu0 0.0
    %108 = vmatpush1.xpose.msra.mxu0 0.0
    %109 = vmatprep.subr.mxu0 0.0
    %110 = vmatpush1.xpose.msra.mxu0 0.0
    %111 = vmatprep.subr.mxu0 0.0
    %112 = vmatpush1.xpose.msra.mxu0 0.0
    %113 = vmatprep.subr.mxu0 0.0
    %114 = vmatpush1.xpose.msra.mxu0 0.0
    %115 = vmatprep.subr.mxu0 0.0
    %116 = vmatpush1.xpose.msra.mxu0 0.0
    %117 = vmatprep.subr.mxu0 0.0
    %118 = vmatpush1.xpose.msra.mxu0 0.0
    %119 = vmatprep.subr.mxu0 0.0
    %120 = vmatpush1.xpose.msra.mxu0 0.0
    %121 = vmatprep.subr.mxu0 0.0
    %122 = vmatpush1.xpose.msra.mxu0 0.0
    %123 = vmatprep.subr.mxu0 0.0
    %124 = vmatpush1.xpose.msra.mxu0 0.0
    %125 = vmatprep.subr.mxu0 0.0
    %126 = vmatpush1.xpose.msra.mxu0 0.0
    %127 = vmatprep.subr.mxu0 0.0
    %128 = vmatpush1.xpose.msra.mxu0 0.0
    %129 = vmatprep.subr.mxu0 0.0
    %130 = vmatpush1.xpose.msra.mxu0 0.0
    %131 = vmatprep.subr.mxu0 0.0
    %132 = vmatpush1.xpose.msra.mxu0 0.0
    %133 = vmatprep.subr.mxu0 0.0
    %134 = vmatpush1.xpose.msra.mxu0 0.0
    %135 = vmatprep.subr.mxu0 0.0
    %136 = vmatpush1.xpose.msra.mxu0 0.0
    %137 = vmatprep.subr.mxu0 0.0
    %138 = vmatpush1.xpose.msra.mxu0 0.0
    %139 = vmatprep.subr.mxu0 0.0
    %140 = vmatpush1.xpose.msra.mxu0 0.0
    %141 = vmatprep.subr.mxu0 0.0
    %142 = vmatpush1.xpose.msra.mxu0 0.0
    %143 = vmatprep.subr.mxu0 0.0
    %144 = vmatpush1.xpose.msra.mxu0 0.0
    %145 = vmatprep.subr.mxu0 0.0
    %146 = vmatpush1.xpose.msra.mxu0 0.0
    %147 = vmatprep.subr.mxu0 0.0
    %148 = vmatpush1.xpose.msra.mxu0 0.0
    %149 = vmatprep.mubr.f32.mxu0 0.0
    %150 = vmatmul.mubr.f32.gmra.mrb[0].mxu0 %v81
    %v151 = vpop.f32.mrb[0].mxu0
    %v152 = vadd.f32 0.0, %v151
    %v153 = vpop.f32.mrb[0].mxu0
    %154 = vdwg.mxu0
    %v155 = vrot.slane %v41, 1
    %v156 = vrot.slane %v42, 1
    %v157 = vsel %vm59, %v43, %v156
    %v158 = vrot.slane %v44, 7
    %v159 = vsel %vm62, %v158, %v157
    %v160 = vrot.slane %v45, 6
    %v161 = vsel %vm65, %v160, %v159
    %v162 = vrot.slane %v46, 5
    %v163 = vsel %vm68, %v162, %v161
    %v164 = vrot.slane %v47, 4
    %v165 = vsel %vm71, %v164, %v163
    %v166 = vrot.slane %v48, 3
    %v167 = vsel %vm74, %v166, %v165
    %v168 = vrot.slane %v49, 2
    %v169 = vsel %vm77, %v168, %v167
    %v170 = vsel %vm79, %v155, 0
    %v172 = vsel %vm79, %v169, 0
    %174 = vmatprep.subr.mxu0 0.0
    %175 = vmatpush1.xpose.msra.mxu0 %v172
    %176 = vmatprep.subr.mxu0 0.0
    %177 = vmatpush1.xpose.msra.mxu0 0.0
    %178 = vmatprep.subr.mxu0 0.0
    %179 = vmatpush1.xpose.msra.mxu0 0.0
    %180 = vmatprep.subr.mxu0 0.0
    %181 = vmatpush1.xpose.msra.mxu0 0.0
    %182 = vmatprep.subr.mxu0 0.0
    %183 = vmatpush1.xpose.msra.mxu0 0.0
    %184 = vmatprep.subr.mxu0 0.0
    %185 = vmatpush1.xpose.msra.mxu0 0.0
    %186 = vmatprep.subr.mxu0 0.0
    %187 = vmatpush1.xpose.msra.mxu0 0.0
    %188 = vmatprep.subr.mxu0 0.0
    %189 = vmatpush1.xpose.msra.mxu0 0.0
    %190 = vmatprep.subr.mxu0 0.0
    %191 = vmatpush1.xpose.msra.mxu0 0.0
    %192 = vmatprep.subr.mxu0 0.0
    %193 = vmatpush1.xpose.msra.mxu0 0.0
    %194 = vmatprep.subr.mxu0 0.0
    %195 = vmatpush1.xpose.msra.mxu0 0.0
    %196 = vmatprep.subr.mxu0 0.0
    %197 = vmatpush1.xpose.msra.mxu0 0.0
    %198 = vmatprep.subr.mxu0 0.0
    %199 = vmatpush1.xpose.msra.mxu0 0.0
    %200 = vmatprep.subr.mxu0 0.0
    %201 = vmatpush1.xpose.msra.mxu0 0.0
    %202 = vmatprep.subr.mxu0 0.0
    %203 = vmatpush1.xpose.msra.mxu0 0.0
    %204 = vmatprep.subr.mxu0 0.0
    %205 = vmatpush1.xpose.msra.mxu0 0.0
    %206 = vmatprep.subr.mxu0 0.0
    %207 = vmatpush1.xpose.msra.mxu0 0.0
    %208 = vmatprep.subr.mxu0 0.0
    %209 = vmatpush1.xpose.msra.mxu0 0.0
    %210 = vmatprep.subr.mxu0 0.0
    %211 = vmatpush1.xpose.msra.mxu0 0.0
    %212 = vmatprep.subr.mxu0 0.0
    %213 = vmatpush1.xpose.msra.mxu0 0.0
    %214 = vmatprep.subr.mxu0 0.0
    %215 = vmatpush1.xpose.msra.mxu0 0.0
    %216 = vmatprep.subr.mxu0 0.0
    %217 = vmatpush1.xpose.msra.mxu0 0.0
    %218 = vmatprep.subr.mxu0 0.0
    %219 = vmatpush1.xpose.msra.mxu0 0.0
    %220 = vmatprep.subr.mxu0 0.0
    %221 = vmatpush1.xpose.msra.mxu0 0.0
    %222 = vmatprep.subr.mxu0 0.0
    %223 = vmatpush1.xpose.msra.mxu0 0.0
    %224 = vmatprep.subr.mxu0 0.0
    %225 = vmatpush1.xpose.msra.mxu0 0.0
    %226 = vmatprep.subr.mxu0 0.0
    %227 = vmatpush1.xpose.msra.mxu0 0.0
    %228 = vmatprep.subr.mxu0 0.0
    %229 = vmatpush1.xpose.msra.mxu0 0.0
    %230 = vmatprep.subr.mxu0 0.0
    %231 = vmatpush1.xpose.msra.mxu0 0.0
    %232 = vmatprep.subr.mxu0 0.0
    %233 = vmatpush1.xpose.msra.mxu0 0.0
    %234 = vmatprep.subr.mxu0 0.0
    %235 = vmatpush1.xpose.msra.mxu0 0.0
    %236 = vmatprep.subr.mxu0 0.0
    %237 = vmatpush1.xpose.msra.mxu0 0.0
    %238 = vmatprep.mubr.f32.mxu0 0.0
    %239 = vmatmul.mubr.f32.gmra.mrb[0].mxu0 %v170
    %v240 = vpop.f32.mrb[0].mxu0
    %v241 = vadd.f32 0.0, %v240
    %v242 = vpop.f32.mrb[0].mxu0
    %243 = vdwg.mxu0
    %v245 = vrot.slane %v241, 7
    %vm247 = vcmask 1040384
    %v248 = vsel %vm247, %v152, %v245
    %vm249 = vcmask 58368
    %v250 = vsel %vm249, %v248, -inf
    %251 = vmax.xlane.f32.xlu0 %v250
    %v252 = vpop.xlane.xlu0 %251
    %v253 = vsub.f32 %v248, %v252
    %v254 = vmul.f32 %v253, 1.442695
    %v255 = vpow.pop %v254
    %v256 = vsel %vm249, %v255, 0.0
    %257 = vadd.xlane.f32.xlu0 %v256
    %v258 = vpop.xlane.xlu0 %257
    %v259 = vrcp.pop %v258
    %v260 = vmul.f32 %v255, %v259
    %261 = vst.msk [vmem:[#allocation7] sm:$0x3] %vm249, %v260
    %vm263 = vcmask 64512
    %v265 = vsel %vm263, %v260, 0
    %267 = vmatprep.subr.mxu0 0.0
    %268 = vmatpush1.msra.mxu0 %v78
    %269 = vmatprep.subr.mxu0 0.0
    %270 = vmatpush1.msra.mxu0 0.0
    %271 = vmatprep.subr.mxu0 0.0
    %272 = vmatpush1.msra.mxu0 0.0
    %273 = vmatprep.subr.mxu0 0.0
    %274 = vmatpush1.msra.mxu0 0.0
    %275 = vmatprep.subr.mxu0 0.0
    %276 = vmatpush1.msra.mxu0 0.0
    %277 = vmatprep.subr.mxu0 0.0
    %278 = vmatpush1.msra.mxu0 0.0
    %279 = vmatprep.subr.mxu0 0.0
    %280 = vmatpush1.msra.mxu0 0.0
    %281 = vmatprep.subr.mxu0 0.0
    %282 = vmatpush1.msra.mxu0 0.0
    %283 = vmatprep.subr.mxu0 0.0
    %284 = vmatpush1.msra.mxu0 0.0
    %285 = vmatprep.subr.mxu0 0.0
    %286 = vmatpush1.msra.mxu0 0.0
    %287 = vmatprep.subr.mxu0 0.0
    %288 = vmatpush1.msra.mxu0 0.0
    %289 = vmatprep.subr.mxu0 0.0
    %290 = vmatpush1.msra.mxu0 0.0
    %291 = vmatprep.subr.mxu0 0.0
    %292 = vmatpush1.msra.mxu0 0.0
    %293 = vmatprep.subr.mxu0 0.0
    %294 = vmatpush1.msra.mxu0 0.0
    %295 = vmatprep.subr.mxu0 0.0
    %296 = vmatpush1.msra.mxu0 0.0
    %297 = vmatprep.subr.mxu0 0.0
    %298 = vmatpush1.msra.mxu0 0.0
    %299 = vmatprep.subr.mxu0 0.0
    %300 = vmatpush1.msra.mxu0 0.0
    %301 = vmatprep.subr.mxu0 0.0
    %302 = vmatpush1.msra.mxu0 0.0
    %303 = vmatprep.subr.mxu0 0.0
    %304 = vmatpush1.msra.mxu0 0.0
    %305 = vmatprep.subr.mxu0 0.0
    %306 = vmatpush1.msra.mxu0 0.0
    %307 = vmatprep.subr.mxu0 0.0
    %308 = vmatpush1.msra.mxu0 0.0
    %309 = vmatprep.subr.mxu0 0.0
    %310 = vmatpush1.msra.mxu0 0.0
    %311 = vmatprep.subr.mxu0 0.0
    %312 = vmatpush1.msra.mxu0 0.0
    %313 = vmatprep.subr.mxu0 0.0
    %314 = vmatpush1.msra.mxu0 0.0
    %315 = vmatprep.subr.mxu0 0.0
    %316 = vmatpush1.msra.mxu0 0.0
    %317 = vmatprep.subr.mxu0 0.0
    %318 = vmatpush1.msra.mxu0 0.0
    %319 = vmatprep.subr.mxu0 0.0
    %320 = vmatpush1.msra.mxu0 0.0
    %321 = vmatprep.subr.mxu0 0.0
    %322 = vmatpush1.msra.mxu0 0.0
    %323 = vmatprep.subr.mxu0 0.0
    %324 = vmatpush1.msra.mxu0 0.0
    %325 = vmatprep.subr.mxu0 0.0
    %326 = vmatpush1.msra.mxu0 0.0
    %327 = vmatprep.subr.mxu0 0.0
    %328 = vmatpush1.msra.mxu0 0.0
    %329 = vmatprep.subr.mxu0 0.0
    %330 = vmatpush1.msra.mxu0 0.0
    %331 = vmatprep.mubr.f32.mxu0 0.0
    %332 = vmatmul.mubr.f32.gmra.mrb[0].mxu0 %v265
    %v333 = vpop.f32.mrb[0].mxu0
    %v334 = vadd.f32 0.0, %v333
    %v335 = vpop.f32.mrb[0].mxu0
    %336 = vdwg.mxu0
    %v337 = vrot.slane %v260, 1
    %v339 = vsel %vm263, %v337, 0
    %341 = vmatprep.subr.mxu0 0.0
    %342 = vmatpush1.msra.mxu0 %v169
    %343 = vmatprep.subr.mxu0 0.0
    %344 = vmatpush1.msra.mxu0 0.0
    %345 = vmatprep.subr.mxu0 0.0
    %346 = vmatpush1.msra.mxu0 0.0
    %347 = vmatprep.subr.mxu0 0.0
    %348 = vmatpush1.msra.mxu0 0.0
    %349 = vmatprep.subr.mxu0 0.0
    %350 = vmatpush1.msra.mxu0 0.0
    %351 = vmatprep.subr.mxu0 0.0
    %352 = vmatpush1.msra.mxu0 0.0
    %353 = vmatprep.subr.mxu0 0.0
    %354 = vmatpush1.msra.mxu0 0.0
    %355 = vmatprep.subr.mxu0 0.0
    %356 = vmatpush1.msra.mxu0 0.0
    %357 = vmatprep.subr.mxu0 0.0
    %358 = vmatpush1.msra.mxu0 0.0
    %359 = vmatprep.subr.mxu0 0.0
    %360 = vmatpush1.msra.mxu0 0.0
    %361 = vmatprep.subr.mxu0 0.0
    %362 = vmatpush1.msra.mxu0 0.0
    %363 = vmatprep.subr.mxu0 0.0
    %364 = vmatpush1.msra.mxu0 0.0
    %365 = vmatprep.subr.mxu0 0.0
    %366 = vmatpush1.msra.mxu0 0.0
    %367 = vmatprep.subr.mxu0 0.0
    %368 = vmatpush1.msra.mxu0 0.0
    %369 = vmatprep.subr.mxu0 0.0
    %370 = vmatpush1.msra.mxu0 0.0
    %371 = vmatprep.subr.mxu0 0.0
    %372 = vmatpush1.msra.mxu0 0.0
    %373 = vmatprep.subr.mxu0 0.0
    %374 = vmatpush1.msra.mxu0 0.0
    %375 = vmatprep.subr.mxu0 0.0
    %376 = vmatpush1.msra.mxu0 0.0
    %377 = vmatprep.subr.mxu0 0.0
    %378 = vmatpush1.msra.mxu0 0.0
    %379 = vmatprep.subr.mxu0 0.0
    %380 = vmatpush1.msra.mxu0 0.0
    %381 = vmatprep.subr.mxu0 0.0
    %382 = vmatpush1.msra.mxu0 0.0
    %383 = vmatprep.subr.mxu0 0.0
    %384 = vmatpush1.msra.mxu0 0.0
    %385 = vmatprep.subr.mxu0 0.0
    %386 = vmatpush1.msra.mxu0 0.0
    %387 = vmatprep.subr.mxu0 0.0
    %388 = vmatpush1.msra.mxu0 0.0
    %389 = vmatprep.subr.mxu0 0.0
    %390 = vmatpush1.msra.mxu0 0.0
    %391 = vmatprep.subr.mxu0 0.0
    %392 = vmatpush1.msra.mxu0 0.0
    %393 = vmatprep.subr.mxu0 0.0
    %394 = vmatpush1.msra.mxu0 0.0
    %395 = vmatprep.subr.mxu0 0.0
    %396 = vmatpush1.msra.mxu0 0.0
    %397 = vmatprep.subr.mxu0 0.0
    %398 = vmatpush1.msra.mxu0 0.0
    %399 = vmatprep.subr.mxu0 0.0
    %400 = vmatpush1.msra.mxu0 0.0
    %401 = vmatprep.subr.mxu0 0.0
    %402 = vmatpush1.msra.mxu0 0.0
    %403 = vmatprep.subr.mxu0 0.0
    %404 = vmatpush1.msra.mxu0 0.0
    %405 = vmatprep.mubr.f32.mxu0 0.0
    %406 = vmatmul.mubr.f32.gmra.mrb[0].mxu0 %v339
    %v407 = vpop.f32.mrb[0].mxu0
    %v408 = vadd.f32 0.0, %v407
    %v409 = vpop.f32.mrb[0].mxu0
    %410 = vdwg.mxu0
    %v412 = vrot.slane %v408, 7
    %v414 = vsel %vm247, %v334, %v412
    %vm415 = vcmask 254976
    %416 = vst.msk [vmem:[#allocation8] sm:$0x3] %vm415, %v414
    // Predicated region
    $region18: #{tpu_custom_call.1} parent=1 // pred_check
      _
    $region19: #{tpu_custom_call.1} parent=1 // pred_check_branch
      %418 = sbr.rel (0) target = $region21
    $region20: #{tpu_custom_call.1} parent=1 // pred_region
      %s420 = ssub.s32 32, 32
      %421 = vsyncadd [#allocation4], %s420
      %s423 = sshll.u32 [#allocation7], 4
      %s424 = int_to_ptr.vmem [resolvable:$true] %s423
      %426 = dma.vmem_to_hbm [thread:$0]  %s424, 32, %s2, [#allocation4]
    $region21: #{tpu_custom_call.1} parent=1 // pred_fallthru
      _
    // Predicated region
    $region22: #{tpu_custom_call.1} parent=1 // pred_check
      _
    $region23: #{tpu_custom_call.1} parent=1 // pred_check_branch
      %428 = sbr.rel (0) target = $region25
    $region24: #{tpu_custom_call.1} parent=1 // pred_region
      %s430 = ssub.s32 32, 32
      %431 = vsyncadd [#allocation9], %s430
      %s433 = sshll.u32 [#allocation8], 4
      %s434 = int_to_ptr.vmem [resolvable:$true] %s433
      %436 = dma.vmem_to_hbm [thread:$0]  %s434, 32, %s3, [#allocation9]
    $region25: #{tpu_custom_call.1} parent=1 // pred_fallthru
      _
    // Predicated region
    $region26: #{tpu_custom_call.1} parent=1 // pred_check
      _
    $region27: #{tpu_custom_call.1} parent=1 // pred_check_branch
      %438 = sbr.rel (0) target = $region29
    $region28: #{tpu_custom_call.1} parent=1 // pred_region
      %439 = dma.done [#allocation4], 32
    $region29: #{tpu_custom_call.1} parent=1 // pred_fallthru
      _
    // Predicated region
    $region30: #{tpu_custom_call.1} parent=1 // pred_check
      _
    $region31: #{tpu_custom_call.1} parent=1 // pred_check_branch
      %441 = sbr.rel (0) target = $region33
    $region32: #{tpu_custom_call.1} parent=1 // pred_region
      %442 = dma.done [#allocation9], 32
    $region33: #{tpu_custom_call.1} parent=1 // pred_fallthru
      _
    %443 = vsyncpa [#allocation3], 1
    %444 = vsyncpa [#allocation6], 1
    %445 = vsyncpa [#allocation4], 1
    %446 = vsyncpa [#allocation9], 1

</llo_original>
